<compile_context>
chip_gen: v6e
topology: v6e:2x2x1
jax: 0.10.0
libtpu: 0.0.40
codegen_flags: <defaults>
</compile_context>

<pallas_src>
import jax
import jax.numpy as jnp
from jax.experimental import pallas as pl
from jax.experimental.pallas import tpu as pltpu


def critic_kernel(x_ref, w1_ref, b1_ref, w2_ref, b2_ref, w3_ref, b3_ref, out_ref):
    x = x_ref[...]                                                    # (TB, F)

    h1 = jnp.dot(x, w1_ref[...], preferred_element_type=jnp.float32) + b1_ref[...]
    h1 = jnp.maximum(h1, 0.0)                                         # (TB, 128)

    h2 = jnp.dot(h1, w2_ref[...], preferred_element_type=jnp.float32) + b2_ref[...]
    h2 = jnp.maximum(h2, 0.0)                                         # (TB, 64)

    # fc3 has a single output feature: contract the feature axis of both
    # operands (same dimension numbers as q @ k.T) so the result comes out as
    # a lane-dense (1, TB) row instead of a (TB, 1) column that would need
    # masked single-lane stores.
    v = jnp.einsum("ok,bk->ob", w3_ref[...], h2,
                   preferred_element_type=jnp.float32)                # (1, TB)
    v = v + b3_ref[0, 0]                                              # scalar bias from SMEM

    out_ref[...] = v.reshape(1, 1, v.shape[1]).astype(out_ref.dtype)  # (1, 1, TB)


def _round_up(n, m):
    return ((n + m - 1) // m) * m


def critic_forward(x, params, *, tile_b=512):
    """Run the fused Critic forward pass. x: (B, F) float32 -> (B, 1) float32."""
    w1, b1, w2, b2, w3, b3 = params
    B, F = x.shape

    # Tile size: up to `tile_b` rows per grid step (sublane-aligned), padded batch.
    TB = min(tile_b, _round_up(B, 8))
    B_pad = _round_up(B, TB)
    G = B_pad // TB
    if B_pad != B:
        x = jnp.pad(x, ((0, B_pad - B), (0, 0)))

    flops = 2 * B_pad * (F * 128 + 128 * 64 + 64)
    bytes_accessed = (B_pad * (F + 1) * 4
                      + (F * 128 + 128 + 128 * 64 + 64 + 64 + 1) * 4)

    out = pl.pallas_call(
        critic_kernel,
        out_shape=jax.ShapeDtypeStruct((G, 1, TB), jnp.float32),
        grid=(G,),
        in_specs=[
            # x: tiled along the batch (sublane) axis.
            pl.BlockSpec((TB, F), lambda i: (i, 0)),
            # Weights / biases: constant block index -> DMA'd once, stay resident.
            pl.BlockSpec((F, 128), lambda i: (0, 0)),
            pl.BlockSpec((1, 128), lambda i: (0, 0)),
            pl.BlockSpec((128, 64), lambda i: (0, 0)),
            pl.BlockSpec((1, 64), lambda i: (0, 0)),
            pl.BlockSpec((1, 64), lambda i: (0, 0)),
            # b3 is a single scalar -> SMEM, not a lane-padded VMEM tile.
            pl.BlockSpec((1, 1), lambda i: (0, 0),
                         memory_space=pltpu.MemorySpace.SMEM),
        ],
        out_specs=pl.BlockSpec((1, 1, TB), lambda i: (i, 0, 0)),
        compiler_params=pltpu.CompilerParams(
            dimension_semantics=("parallel",)),
        cost_estimate=pl.CostEstimate(
            flops=flops, transcendentals=0, bytes_accessed=bytes_accessed),
    )(x, w1, b1, w2, b2, w3, b3)

    # (G, 1, TB) row-major flattens to padded batch order; slice off the padding.
    return out.reshape(B_pad, 1)[:B]


def init_params(key, input_size=7):
    """Deterministic init mimicking PyTorch nn.Linear default U[-1/sqrt(in), 1/sqrt(in)].

    w1: (F, 128), b1: (1, 128), w2: (128, 64), b2: (1, 64),
    w3: (1, 64) (PyTorch fc3.weight layout), b3: (1, 1).
    """
    layers = [(input_size, 128), (128, 64), (64, 1)]
    params = []
    for li, (fan_in, fan_out) in enumerate(layers):
        key, kw, kb = jax.random.split(key, 3)
        bound = 1.0 / jnp.sqrt(fan_in)
        if li < 2:
            w = jax.random.uniform(kw, (fan_in, fan_out), jnp.float32, -bound, bound)
        else:  # fc3: keep as a (1, fan_in) row for the in-kernel contraction
            w = jax.random.uniform(kw, (fan_out, fan_in), jnp.float32, -bound, bound)
        b = jax.random.uniform(kb, (1, fan_out), jnp.float32, -bound, bound)
        params += [w, b]
    return tuple(params)


def critic_reference(x, params):
    w1, b1, w2, b2, w3, b3 = params
    h1 = jnp.maximum(x @ w1 + b1, 0.0)
    h2 = jnp.maximum(h1 @ w2 + b2, 0.0)
    return h2 @ w3.T + b3


if __name__ == "__main__":
    key = jax.random.PRNGKey(0)
    key, kx = jax.random.split(key)

    B, INPUT_SIZE = 8, 7
    x = jax.random.normal(kx, (B, INPUT_SIZE), jnp.float32)
    params = init_params(key, INPUT_SIZE)

    out = jax.block_until_ready(critic_forward(x, params))
    ref = critic_reference(x, params)
    assert out.shape == (B, 1)
    assert jnp.allclose(out, ref, atol=1e-5, rtol=1e-5)

    # Also exercise the multi-tile grid path + ragged-batch padding.
    key, kx2 = jax.random.split(key)
    B2 = 1200
    x2 = jax.random.normal(kx2, (B2, INPUT_SIZE), jnp.float32)
    out2 = jax.block_until_ready(critic_forward(x2, params))
    ref2 = critic_reference(x2, params)
    assert out2.shape == (B2, 1)
    assert jnp.allclose(out2, ref2, atol=1e-4, rtol=1e-4)

    print("KERNEL_OK")
</pallas_src>

<mosaic_0001>
module attributes {stable_mosaic.version = 11 : i64} {
  func.func @critic_kernel(%arg0: i32, %arg1: memref<8x7xf32, #tpu.memory_space<vmem>>, %arg2: memref<7x128xf32, #tpu.memory_space<vmem>>, %arg3: memref<1x128xf32, #tpu.memory_space<vmem>>, %arg4: memref<128x64xf32, #tpu.memory_space<vmem>>, %arg5: memref<1x64xf32, #tpu.memory_space<vmem>>, %arg6: memref<1x64xf32, #tpu.memory_space<vmem>>, %arg7: memref<1x1xf32, #tpu.memory_space<smem>>, %arg8: memref<1x1x8xf32, #tpu.memory_space<vmem>>) attributes {dimension_semantics = [#tpu.dimension_semantics<parallel>], iteration_bounds = array<i64: 1>, scalar_prefetch = 0 : i64, scratch_operands = 0 : i64, tpu.core_type = #tpu.core_type<tc>, window_params = [{transform_indices = @transform_0, window_bounds = array<i64: 8, 7>}, {pipeline_mode = #tpu.pipeline_mode<synchronous>, transform_indices = @transform_1, window_bounds = array<i64: 7, 128>}, {pipeline_mode = #tpu.pipeline_mode<synchronous>, transform_indices = @transform_2, window_bounds = array<i64: 1, 128>}, {pipeline_mode = #tpu.pipeline_mode<synchronous>, transform_indices = @transform_3, window_bounds = array<i64: 128, 64>}, {pipeline_mode = #tpu.pipeline_mode<synchronous>, transform_indices = @transform_4, window_bounds = array<i64: 1, 64>}, {pipeline_mode = #tpu.pipeline_mode<synchronous>, transform_indices = @transform_5, window_bounds = array<i64: 1, 64>}, {transform_indices = @transform_6, window_bounds = array<i64: 1, 1>}, {transform_indices = @transform_7, window_bounds = array<i64: 1, 1, 8>}]} {
    %c0 = arith.constant 0 : index
    %c0_0 = arith.constant 0 : index
    %0 = vector.load %arg1[%c0, %c0_0] : memref<8x7xf32, #tpu.memory_space<vmem>>, vector<8x7xf32>
    %c0_1 = arith.constant 0 : index
    %c0_2 = arith.constant 0 : index
    %1 = vector.load %arg2[%c0_1, %c0_2] : memref<7x128xf32, #tpu.memory_space<vmem>>, vector<7x128xf32>
    %cst = arith.constant dense<0.000000e+00> : vector<8x128xf32>
    %2 = tpu.matmul %0, %1, %cst {dimension_numbers = #tpu.dot_dimension_numbers<[1], [0], [0], [1], [0, 0, 1, 1], [], []>} : vector<8x7xf32>, vector<7x128xf32>, vector<8x128xf32> -> vector<8x128xf32>
    %c0_3 = arith.constant 0 : index
    %c0_4 = arith.constant 0 : index
    %3 = vector.load %arg3[%c0_3, %c0_4] : memref<1x128xf32, #tpu.memory_space<vmem>>, vector<1x128xf32>
    %4 = vector.broadcast %3 : vector<1x128xf32> to vector<8x128xf32>
    %5 = arith.addf %2, %4 : vector<8x128xf32>
    %cst_5 = arith.constant 0.000000e+00 : f32
    %6 = vector.broadcast %cst_5 : f32 to vector<8x128xf32>
    %7 = arith.maximumf %5, %6 : vector<8x128xf32>
    %c0_6 = arith.constant 0 : index
    %c0_7 = arith.constant 0 : index
    %8 = vector.load %arg4[%c0_6, %c0_7] : memref<128x64xf32, #tpu.memory_space<vmem>>, vector<128x64xf32>
    %cst_8 = arith.constant dense<0.000000e+00> : vector<8x64xf32>
    %9 = tpu.matmul %7, %8, %cst_8 {dimension_numbers = #tpu.dot_dimension_numbers<[1], [0], [0], [1], [0, 0, 1, 1], [], []>} : vector<8x128xf32>, vector<128x64xf32>, vector<8x64xf32> -> vector<8x64xf32>
    %c0_9 = arith.constant 0 : index
    %c0_10 = arith.constant 0 : index
    %10 = vector.load %arg5[%c0_9, %c0_10] : memref<1x64xf32, #tpu.memory_space<vmem>>, vector<1x64xf32>
    %11 = vector.broadcast %10 : vector<1x64xf32> to vector<8x64xf32>
    %12 = arith.addf %9, %11 : vector<8x64xf32>
    %cst_11 = arith.constant 0.000000e+00 : f32
    %13 = vector.broadcast %cst_11 : f32 to vector<8x64xf32>
    %14 = arith.maximumf %12, %13 : vector<8x64xf32>
    %c0_12 = arith.constant 0 : index
    %c0_13 = arith.constant 0 : index
    %15 = vector.load %arg6[%c0_12, %c0_13] : memref<1x64xf32, #tpu.memory_space<vmem>>, vector<1x64xf32>
    "tpu.trace_start"() <{level = 10 : i32, message = "ok,bk->ob"}> : () -> ()
    %cst_14 = arith.constant dense<0.000000e+00> : vector<1x8xf32>
    %16 = tpu.matmul %15, %14, %cst_14 {dimension_numbers = #tpu.dot_dimension_numbers<[1], [1], [0], [0], [0, 0, 1, 0], [], []>} : vector<1x64xf32>, vector<8x64xf32>, vector<1x8xf32> -> vector<1x8xf32>
    "tpu.trace_stop"() : () -> ()
    %c0_15 = arith.constant 0 : index
    %c0_16 = arith.constant 0 : index
    %17 = memref.load %arg7[%c0_15, %c0_16] : memref<1x1xf32, #tpu.memory_space<smem>>
    %18 = vector.broadcast %17 : f32 to vector<1x8xf32>
    %19 = arith.addf %16, %18 : vector<1x8xf32>
    %20 = vector.shape_cast %19 : vector<1x8xf32> to vector<1x1x8xf32>
    %c0_17 = arith.constant 0 : index
    %c0_18 = arith.constant 0 : index
    %c0_19 = arith.constant 0 : index
    %21 = vector.load %arg8[%c0_17, %c0_18, %c0_19] : memref<1x1x8xf32, #tpu.memory_space<vmem>>, vector<1x1x8xf32>
    tpu.vector_store %arg8[%c0_17, %c0_18, %c0_19], %20 {strides = array<i32>} : memref<1x1x8xf32, #tpu.memory_space<vmem>>, vector<1x1x8xf32>,
    return
  }
  func.func @transform_0(%arg0: i32) -> (i32, i32) {
    %c0_i32 = arith.constant 0 : i32
    %c0_i32_0 = arith.constant 0 : i32
    return %arg0, %c0_i32 : i32, i32
  }
  func.func @transform_1(%arg0: i32) -> (i32, i32) {
    %c0_i32 = arith.constant 0 : i32
    %c0_i32_0 = arith.constant 0 : i32
    %c0_i32_1 = arith.constant 0 : i32
    return %c0_i32, %c0_i32_0 : i32, i32
  }
  func.func @transform_2(%arg0: i32) -> (i32, i32) {
    %c0_i32 = arith.constant 0 : i32
    %c0_i32_0 = arith.constant 0 : i32
    %c0_i32_1 = arith.constant 0 : i32
    return %c0_i32, %c0_i32_0 : i32, i32
  }
  func.func @transform_3(%arg0: i32) -> (i32, i32) {
    %c0_i32 = arith.constant 0 : i32
    %c0_i32_0 = arith.constant 0 : i32
    %c0_i32_1 = arith.constant 0 : i32
    return %c0_i32, %c0_i32_0 : i32, i32
  }
  func.func @transform_4(%arg0: i32) -> (i32, i32) {
    %c0_i32 = arith.constant 0 : i32
    %c0_i32_0 = arith.constant 0 : i32
    %c0_i32_1 = arith.constant 0 : i32
    return %c0_i32, %c0_i32_0 : i32, i32
  }
  func.func @transform_5(%arg0: i32) -> (i32, i32) {
    %c0_i32 = arith.constant 0 : i32
    %c0_i32_0 = arith.constant 0 : i32
    %c0_i32_1 = arith.constant 0 : i32
    return %c0_i32, %c0_i32_0 : i32, i32
  }
  func.func @transform_6(%arg0: i32) -> (i32, i32) {
    %c0_i32 = arith.constant 0 : i32
    %c0_i32_0 = arith.constant 0 : i32
    %c0_i32_1 = arith.constant 0 : i32
    return %c0_i32, %c0_i32_0 : i32, i32
  }
  func.func @transform_7(%arg0: i32) -> (i32, i32, i32) {
    %c0_i32 = arith.constant 0 : i32
    %c0_i32_0 = arith.constant 0 : i32
    %c0_i32_1 = arith.constant 0 : i32
    return %arg0, %c0_i32, %c0_i32_0 : i32, i32, i32
  }
}

</mosaic_0001>

<llo_original>
// kernel: tpu_custom_call.1
$region0: #{tpu_custom_call.1}
  #allocation0 [shape = 'u32[]', space=smem, size = 0x4, offset = 0x4, fixed_abs, tag = 'smem constant byte address 0x4 - core index']
  #allocation1 [shape = 'u32[144,128]{1,0:T(1,128)}', space=vmem, size = 0x12000, scoped, tag = 'internal scratch']
  #allocation2 [shape = 'f32[1,1]{1,0:T(1,128)S(6)}', space=smem, size = 0x200, scoped, tag = 'scoped memory for tpu_custom_call.1']
  %s0 = inlined_call_operand.vmem [shape: f32[8,7], index: 0, kind: input, shape index: {}]
  %s1 = inlined_call_operand.vmem [shape: f32[7,128], index: 1, kind: input, shape index: {}]
  %s2 = inlined_call_operand.vmem [shape: f32[1,128], index: 2, kind: input, shape index: {}]
  %s3 = inlined_call_operand.vmem [shape: f32[128,64], index: 3, kind: input, shape index: {}]
  %s4 = inlined_call_operand.vmem [shape: f32[1,64], index: 4, kind: input, shape index: {}]
  %s5 = inlined_call_operand.vmem [shape: f32[1,64], index: 5, kind: input, shape index: {}]
  %s6 = inlined_call_operand.<no memory space> [shape: f32[1,1], index: 6, kind: input, shape index: {}]
  %s7 = inlined_call_operand.hbm [shape: f32[1,1,8], index: 7, kind: output, shape index: {}]
  %s8 = sld [smem:[#allocation0]]
  $region38: #{tpu_custom_call.1} parent=0
    _
  %s10 = ssub.s32 1, %s8
  %s11 = scalar_select 0, %s10, %s8
  %12 = sst [smem:[#allocation2]] %s6
  $region1: #{tpu_custom_call.1} parent=0
    #allocation3 [shape = 'u8[512]{0}', space=vmem, size = 0x400, scoped, tag = 'output window, operand 0, single buffered']
    #allocation4 [shape = 's32[1]{0}', space=sflag, size = 0x4, scoped, tag = 'scoped memory for tpu_custom_call.1']
    %13 = vsyncpa [#allocation4], 0
    // Predicated region
    $region2: #{tpu_custom_call.1} parent=1 // pred_check
      _
    $region3: #{tpu_custom_call.1} parent=1 // pred_check_branch
      %15 = sbr.rel (0) target = $region5
    $region4: #{tpu_custom_call.1} parent=1 // pred_region
      _
    $region5: #{tpu_custom_call.1} parent=1 // pred_fallthru
      _
    // Predicated region
    $region6: #{tpu_custom_call.1} parent=1 // pred_check
      _
    $region7: #{tpu_custom_call.1} parent=1 // pred_check_branch
      %17 = sbr.rel (0) target = $region9
    $region8: #{tpu_custom_call.1} parent=1 // pred_region
      _
    $region9: #{tpu_custom_call.1} parent=1 // pred_fallthru
      _
    // Predicated region
    $region10: #{tpu_custom_call.1} parent=1 // pred_check
      _
    $region11: #{tpu_custom_call.1} parent=1 // pred_check_branch
      %19 = sbr.rel (0) target = $region13
    $region12: #{tpu_custom_call.1} parent=1 // pred_region
      _
    $region13: #{tpu_custom_call.1} parent=1 // pred_fallthru
      _
    // Predicated region
    $region14: #{tpu_custom_call.1} parent=1 // pred_check
      _
    $region15: #{tpu_custom_call.1} parent=1 // pred_check_branch
      %21 = sbr.rel (0) target = $region17
    $region16: #{tpu_custom_call.1} parent=1 // pred_region
      _
    $region17: #{tpu_custom_call.1} parent=1 // pred_fallthru
      _
    // Predicated region
    $region18: #{tpu_custom_call.1} parent=1 // pred_check
      _
    $region19: #{tpu_custom_call.1} parent=1 // pred_check_branch
      %23 = sbr.rel (0) target = $region21
    $region20: #{tpu_custom_call.1} parent=1 // pred_region
      _
    $region21: #{tpu_custom_call.1} parent=1 // pred_fallthru
      _
    // Predicated region
    $region22: #{tpu_custom_call.1} parent=1 // pred_check
      _
    $region23: #{tpu_custom_call.1} parent=1 // pred_check_branch
      %25 = sbr.rel (0) target = $region25
    $region24: #{tpu_custom_call.1} parent=1 // pred_region
      _
    $region25: #{tpu_custom_call.1} parent=1 // pred_fallthru
      _
    // Predicated region
    $region26: #{tpu_custom_call.1} parent=1 // pred_check
      _
    $region27: #{tpu_custom_call.1} parent=1 // pred_check_branch
      %27 = sbr.rel (0) target = $region29
    $region28: #{tpu_custom_call.1} parent=1 // pred_region
      _
    $region29: #{tpu_custom_call.1} parent=1 // pred_fallthru
      _
    %v28 = vld [vmem:[%s0] sm:$0xff]
    %v29 = vld [vmem:[%s1] sm:$0x7f]
    %v30 = vld [vmem:[%s2] sm:$0x1]
    %v32 = vlaneseq
    %v33 = vshrl.u32 %v32, 7
    %v34 = vsub.s32 0, %v33
    %v35 = vrot.slane %v30, %v34
    %vm37 = vcmask 56320
    %v39 = vsel %vm37, %v28, 0
    %vm41 = vcmask 1046528
    %v43 = vsel %vm41, %v29, 0
    %45 = vmatprep.subr.mxu0 0.0
    %46 = vmatpush1.msra.mxu0 0.0
    %47 = vmatprep.subr.mxu0 0.0
    %48 = vmatpush1.msra.mxu0 0.0
    %49 = vmatprep.subr.mxu0 0.0
    %50 = vmatpush1.msra.mxu0 0.0
    %51 = vmatprep.subr.mxu0 0.0
    %52 = vmatpush1.msra.mxu0 0.0
    %53 = vmatprep.subr.mxu0 0.0
    %54 = vmatpush1.msra.mxu0 0.0
    %55 = vmatprep.subr.mxu0 0.0
    %56 = vmatpush1.msra.mxu0 0.0
    %57 = vmatprep.subr.mxu0 0.0
    %58 = vmatpush1.msra.mxu0 0.0
    %59 = vmatprep.subr.mxu0 0.0
    %60 = vmatpush1.msra.mxu0 0.0
    %61 = vmatprep.subr.mxu0 0.0
    %62 = vmatpush1.msra.mxu0 0.0
    %63 = vmatprep.subr.mxu0 0.0
    %64 = vmatpush1.msra.mxu0 0.0
    %65 = vmatprep.subr.mxu0 0.0
    %66 = vmatpush1.msra.mxu0 0.0
    %67 = vmatprep.subr.mxu0 0.0
    %68 = vmatpush1.msra.mxu0 0.0
    %69 = vmatprep.subr.mxu0 0.0
    %70 = vmatpush1.msra.mxu0 0.0
    %71 = vmatprep.subr.mxu0 0.0
    %72 = vmatpush1.msra.mxu0 0.0
    %73 = vmatprep.subr.mxu0 0.0
    %74 = vmatpush1.msra.mxu0 0.0
    %75 = vmatprep.subr.mxu0 0.0
    %76 = vmatpush1.msra.mxu0 %v43
    %77 = vmatprep.subr.mxu0 0.0
    %78 = vmatpush2.msra.mxu0 0.0
    %79 = vmatprep.subr.mxu0 0.0
    %80 = vmatpush2.msra.mxu0 0.0
    %81 = vmatprep.subr.mxu0 0.0
    %82 = vmatpush2.msra.mxu0 0.0
    %83 = vmatprep.subr.mxu0 0.0
    %84 = vmatpush2.msra.mxu0 0.0
    %85 = vmatprep.subr.mxu0 0.0
    %86 = vmatpush2.msra.mxu0 0.0
    %87 = vmatprep.subr.mxu0 0.0
    %88 = vmatpush2.msra.mxu0 0.0
    %89 = vmatprep.subr.mxu0 0.0
    %90 = vmatpush2.msra.mxu0 0.0
    %91 = vmatprep.subr.mxu0 0.0
    %92 = vmatpush2.msra.mxu0 0.0
    %93 = vmatprep.subr.mxu0 0.0
    %94 = vmatpush2.msra.mxu0 0.0
    %95 = vmatprep.subr.mxu0 0.0
    %96 = vmatpush2.msra.mxu0 0.0
    %97 = vmatprep.subr.mxu0 0.0
    %98 = vmatpush2.msra.mxu0 0.0
    %99 = vmatprep.subr.mxu0 0.0
    %100 = vmatpush2.msra.mxu0 0.0
    %101 = vmatprep.subr.mxu0 0.0
    %102 = vmatpush2.msra.mxu0 0.0
    %103 = vmatprep.subr.mxu0 0.0
    %104 = vmatpush2.msra.mxu0 0.0
    %105 = vmatprep.subr.mxu0 0.0
    %106 = vmatpush2.msra.mxu0 0.0
    %107 = vmatprep.subr.mxu0 0.0
    %108 = vmatpush2.msra.mxu0 0.0
    %109 = vmatprep.mubr.f32.mxu0 0.0
    %110 = vmatmul.mubr.f32.gmra.mxu0 %v39
    %v111 = vpop.f32.mrf.mxu0
    %v112 = vadd.f32 %v35, %v111
    %v113 = vpop.f32.mrf.mxu0
    %114 = vdwg.mxu0
    %v115 = vmax.f32 %v112, 0.0
    %v116 = vld [vmem:[%s3] sm:$0xff]
    %v117 = vld [vmem:[%s3 + $0x8] sm:$0xff]
    %v118 = vld [vmem:[%s3 + $0x10] sm:$0xff]
    %v119 = vld [vmem:[%s3 + $0x18] sm:$0xff]
    %v120 = vld [vmem:[%s3 + $0x20] sm:$0xff]
    %v121 = vld [vmem:[%s3 + $0x28] sm:$0xff]
    %v122 = vld [vmem:[%s3 + $0x30] sm:$0xff]
    %v123 = vld [vmem:[%s3 + $0x38] sm:$0xff]
    %v124 = vld [vmem:[%s3 + $0x40] sm:$0xff]
    %v125 = vld [vmem:[%s3 + $0x48] sm:$0xff]
    %v126 = vld [vmem:[%s3 + $0x50] sm:$0xff]
    %v127 = vld [vmem:[%s3 + $0x58] sm:$0xff]
    %v128 = vld [vmem:[%s3 + $0x60] sm:$0xff]
    %v129 = vld [vmem:[%s3 + $0x68] sm:$0xff]
    %v130 = vld [vmem:[%s3 + $0x70] sm:$0xff]
    %v131 = vld [vmem:[%s3 + $0x78] sm:$0xff]
    %v132 = vld [vmem:[%s4] sm:$0x1]
    %v134 = vlaneseq
    %v135 = vshrl.u32 %v134, 7
    %v136 = vsub.s32 0, %v135
    %v137 = vrot.slane %v132, %v136
    %139 = vmatprep.subr.mxu0 0.0
    %140 = vmatpush1.msra.mxu0 %v131
    %141 = vmatprep.subr.mxu0 0.0
    %142 = vmatpush1.msra.mxu0 %v130
    %143 = vmatprep.subr.mxu0 0.0
    %144 = vmatpush1.msra.mxu0 %v129
    %145 = vmatprep.subr.mxu0 0.0
    %146 = vmatpush1.msra.mxu0 %v128
    %147 = vmatprep.subr.mxu0 0.0
    %148 = vmatpush1.msra.mxu0 %v127
    %149 = vmatprep.subr.mxu0 0.0
    %150 = vmatpush1.msra.mxu0 %v126
    %151 = vmatprep.subr.mxu0 0.0
    %152 = vmatpush1.msra.mxu0 %v125
    %153 = vmatprep.subr.mxu0 0.0
    %154 = vmatpush1.msra.mxu0 %v124
    %155 = vmatprep.subr.mxu0 0.0
    %156 = vmatpush1.msra.mxu0 %v123
    %157 = vmatprep.subr.mxu0 0.0
    %158 = vmatpush1.msra.mxu0 %v122
    %159 = vmatprep.subr.mxu0 0.0
    %160 = vmatpush1.msra.mxu0 %v121
    %161 = vmatprep.subr.mxu0 0.0
    %162 = vmatpush1.msra.mxu0 %v120
    %163 = vmatprep.subr.mxu0 0.0
    %164 = vmatpush1.msra.mxu0 %v119
    %165 = vmatprep.subr.mxu0 0.0
    %166 = vmatpush1.msra.mxu0 %v118
    %167 = vmatprep.subr.mxu0 0.0
    %168 = vmatpush1.msra.mxu0 %v117
    %169 = vmatprep.subr.mxu0 0.0
    %170 = vmatpush1.msra.mxu0 %v116
    %171 = vmatprep.subr.mxu0 0.0
    %172 = vmatpush2.msra.mxu0 0.0
    %173 = vmatprep.subr.mxu0 0.0
    %174 = vmatpush2.msra.mxu0 0.0
    %175 = vmatprep.subr.mxu0 0.0
    %176 = vmatpush2.msra.mxu0 0.0
    %177 = vmatprep.subr.mxu0 0.0
    %178 = vmatpush2.msra.mxu0 0.0
    %179 = vmatprep.subr.mxu0 0.0
    %180 = vmatpush2.msra.mxu0 0.0
    %181 = vmatprep.subr.mxu0 0.0
    %182 = vmatpush2.msra.mxu0 0.0
    %183 = vmatprep.subr.mxu0 0.0
    %184 = vmatpush2.msra.mxu0 0.0
    %185 = vmatprep.subr.mxu0 0.0
    %186 = vmatpush2.msra.mxu0 0.0
    %187 = vmatprep.subr.mxu0 0.0
    %188 = vmatpush2.msra.mxu0 0.0
    %189 = vmatprep.subr.mxu0 0.0
    %190 = vmatpush2.msra.mxu0 0.0
    %191 = vmatprep.subr.mxu0 0.0
    %192 = vmatpush2.msra.mxu0 0.0
    %193 = vmatprep.subr.mxu0 0.0
    %194 = vmatpush2.msra.mxu0 0.0
    %195 = vmatprep.subr.mxu0 0.0
    %196 = vmatpush2.msra.mxu0 0.0
    %197 = vmatprep.subr.mxu0 0.0
    %198 = vmatpush2.msra.mxu0 0.0
    %199 = vmatprep.subr.mxu0 0.0
    %200 = vmatpush2.msra.mxu0 0.0
    %201 = vmatprep.subr.mxu0 0.0
    %202 = vmatpush2.msra.mxu0 0.0
    %203 = vmatprep.mubr.f32.mxu0 0.0
    %204 = vmatmul.mubr.f32.gmra.mxu0 %v115
    %v205 = vpop.f32.mrf.mxu0
    %v206 = vadd.f32 %v137, %v205
    %v207 = vpop.f32.mrf.mxu0
    %208 = vdwg.mxu0
    %v209 = vmax.f32 %v206, 0.0
    %v210 = vld [vmem:[%s5] sm:$0x1]
    %s211 = sld [smem:[#allocation2]]
    %v212 = vstv %s211
    %vm213 = vcmask 523264
    %v215 = vsel %vm213, %v210, 0
    %v218 = vsel %vm213, %v209, 0
    %220 = vmatprep.subr.mxu0 0.0
    %221 = vmatpush1.xpose.msra.mxu0 0.0
    %222 = vmatprep.subr.mxu0 0.0
    %223 = vmatpush1.xpose.msra.mxu0 0.0
    %224 = vmatprep.subr.mxu0 0.0
    %225 = vmatpush1.xpose.msra.mxu0 0.0
    %226 = vmatprep.subr.mxu0 0.0
    %227 = vmatpush1.xpose.msra.mxu0 0.0
    %228 = vmatprep.subr.mxu0 0.0
    %229 = vmatpush1.xpose.msra.mxu0 0.0
    %230 = vmatprep.subr.mxu0 0.0
    %231 = vmatpush1.xpose.msra.mxu0 0.0
    %232 = vmatprep.subr.mxu0 0.0
    %233 = vmatpush1.xpose.msra.mxu0 0.0
    %234 = vmatprep.subr.mxu0 0.0
    %235 = vmatpush1.xpose.msra.mxu0 0.0
    %236 = vmatprep.subr.mxu0 0.0
    %237 = vmatpush1.xpose.msra.mxu0 0.0
    %238 = vmatprep.subr.mxu0 0.0
    %239 = vmatpush1.xpose.msra.mxu0 0.0
    %240 = vmatprep.subr.mxu0 0.0
    %241 = vmatpush1.xpose.msra.mxu0 0.0
    %242 = vmatprep.subr.mxu0 0.0
    %243 = vmatpush1.xpose.msra.mxu0 0.0
    %244 = vmatprep.subr.mxu0 0.0
    %245 = vmatpush1.xpose.msra.mxu0 0.0
    %246 = vmatprep.subr.mxu0 0.0
    %247 = vmatpush1.xpose.msra.mxu0 0.0
    %248 = vmatprep.subr.mxu0 0.0
    %249 = vmatpush1.xpose.msra.mxu0 0.0
    %250 = vmatprep.subr.mxu0 0.0
    %251 = vmatpush1.xpose.msra.mxu0 %v218
    %252 = vmatprep.subr.mxu0 0.0
    %253 = vmatpush2.xpose.msra.mxu0 0.0
    %254 = vmatprep.subr.mxu0 0.0
    %255 = vmatpush2.xpose.msra.mxu0 0.0
    %256 = vmatprep.subr.mxu0 0.0
    %257 = vmatpush2.xpose.msra.mxu0 0.0
    %258 = vmatprep.subr.mxu0 0.0
    %259 = vmatpush2.xpose.msra.mxu0 0.0
    %260 = vmatprep.subr.mxu0 0.0
    %261 = vmatpush2.xpose.msra.mxu0 0.0
    %262 = vmatprep.subr.mxu0 0.0
    %263 = vmatpush2.xpose.msra.mxu0 0.0
    %264 = vmatprep.subr.mxu0 0.0
    %265 = vmatpush2.xpose.msra.mxu0 0.0
    %266 = vmatprep.subr.mxu0 0.0
    %267 = vmatpush2.xpose.msra.mxu0 0.0
    %268 = vmatprep.subr.mxu0 0.0
    %269 = vmatpush2.xpose.msra.mxu0 0.0
    %270 = vmatprep.subr.mxu0 0.0
    %271 = vmatpush2.xpose.msra.mxu0 0.0
    %272 = vmatprep.subr.mxu0 0.0
    %273 = vmatpush2.xpose.msra.mxu0 0.0
    %274 = vmatprep.subr.mxu0 0.0
    %275 = vmatpush2.xpose.msra.mxu0 0.0
    %276 = vmatprep.subr.mxu0 0.0
    %277 = vmatpush2.xpose.msra.mxu0 0.0
    %278 = vmatprep.subr.mxu0 0.0
    %279 = vmatpush2.xpose.msra.mxu0 0.0
    %280 = vmatprep.subr.mxu0 0.0
    %281 = vmatpush2.xpose.msra.mxu0 0.0
    %282 = vmatprep.subr.mxu0 0.0
    %283 = vmatpush2.xpose.msra.mxu0 0.0
    %284 = vmatprep.mubr.f32.mxu0 0.0
    %285 = vmatmul.mubr.f32.gmra.mxu0 %v215
    %v286 = vpop.f32.mrf.mxu0
    %v287 = vadd.f32 %v212, %v286
    %v288 = vpop.f32.mrf.mxu0
    %289 = vdwg.mxu0
    %vm290 = vcmask 57344
    %291 = vst.msk [vmem:[#allocation3] sm:$0x1] %vm290, %v287
    // Predicated region
    $region30: #{tpu_custom_call.1} parent=1 // pred_check
      _
    $region31: #{tpu_custom_call.1} parent=1 // pred_check_branch
      %293 = sbr.rel (0) target = $region33
    $region32: #{tpu_custom_call.1} parent=1 // pred_region
      %s295 = ssub.s32 16, 16
      %296 = vsyncadd [#allocation4], %s295
      %s298 = sshll.u32 [#allocation3], 4
      %s299 = int_to_ptr.vmem [resolvable:$true] %s298
      %301 = dma.vmem_to_hbm [thread:$0]  %s299, 16, %s7, [#allocation4]
    $region33: #{tpu_custom_call.1} parent=1 // pred_fallthru
      _
    // Predicated region
    $region34: #{tpu_custom_call.1} parent=1 // pred_check
      _
    $region35: #{tpu_custom_call.1} parent=1 // pred_check_branch
      %303 = sbr.rel (0) target = $region37
    $region36: #{tpu_custom_call.1} parent=1 // pred_region
      %304 = dma.done [#allocation4], 16
    $region37: #{tpu_custom_call.1} parent=1 // pred_fallthru
      _
    %305 = vsyncpa [#allocation4], 1

</llo_original>
